<compile_context>
chip_gen: v6e
topology: v6e:2x2x1
jax: 0.10.0
libtpu: 0.0.40
codegen_flags: <defaults>
</compile_context>

<pallas_src>
import jax
import jax.numpy as jnp
from jax.experimental import pallas as pl
from jax.experimental.pallas import tpu as pltpu

_LANE = 128  # lane width; fused RHS / value / output slab width


def _round_up(x, m):
    return (x + m - 1) // m * m


def _pick_tile(total, cands=(512, 256, 128), min_tiles=1):
    """Largest candidate tile that divides `total` and keeps >= min_tiles."""
    for t in cands:
        if total % t == 0 and total // t >= min_tiles:
            return t
    return 128


# --------------------------------------------------------------------------
# Kernel 1: fused projection
#   res = x @ [ W | W@a1 | W@a2 | 0-pad ]        (tile, 128) f32
#   outputs: bf16 value slab + f32 [Wh1 | Wh2] score pair
# --------------------------------------------------------------------------
def make_proj_kernel(f_out: int):
    def proj_kernel(x_ref, rhs_ref, whv_ref, sc_ref):
        res = jnp.dot(x_ref[...], rhs_ref[...],
                      preferred_element_type=jnp.float32)
        whv_ref[...] = res.astype(jnp.bfloat16)      # value slab for kernel 2
        sc_ref[...] = res[:, f_out:f_out + 2]        # [Wh1 | Wh2] in f32
    return proj_kernel


# --------------------------------------------------------------------------
# Kernel 2: row-tiled masked attention with online (flash-style) softmax.
# Accumulates directly into out_ref (resident across the key axis).
# --------------------------------------------------------------------------
def make_attention_kernel(alpha: float, tk: int, resident_whv: bool):
    def attn_kernel(wh1_ref, wh2_ref, adj_ref, whv_ref, out_ref, m_sc, l_sc):
        j = pl.program_id(1)

        @pl.when(j == 0)
        def _():
            m_sc[...] = jnp.full_like(m_sc, -jnp.inf)
            l_sc[...] = jnp.zeros_like(l_sc)
            out_ref[...] = jnp.zeros_like(out_ref)

        # e[q, k] = Wh1[q] + Wh2[k]   (TQ, TK); all score math in f32.
        e = wh1_ref[...] + wh2_ref[...]               # (TQ,1) + (1,TK)
        e = jnp.where(e > 0.0, e, alpha * e)          # LeakyReLU
        e = jnp.where(adj_ref[...] != 0, e, -9e15)    # int8 mask, no cast

        # Online softmax update (f32).
        m_prev = m_sc[...]
        m_new = jnp.maximum(m_prev, jnp.max(e, axis=-1, keepdims=True))
        corr = jnp.exp(m_prev - m_new)
        p = jnp.exp(e - m_new)                        # (TQ, TK) f32
        l_sc[...] = corr * l_sc[...] + jnp.sum(p, axis=-1, keepdims=True)

        if resident_whv:
            start = pl.multiple_of(j * tk, tk)
            v = whv_ref[pl.ds(start, tk), :]          # slice resident slab
        else:
            v = whv_ref[...]                          # streamed (tk, 128)

        out_ref[...] = corr * out_ref[...] + jnp.dot(
            p.astype(jnp.bfloat16), v, preferred_element_type=jnp.float32)
        m_sc[...] = m_new

        @pl.when(j == pl.num_programs(1) - 1)
        def _():
            inv_l = pl.reciprocal(l_sc[...], approx=True)     # EUP slot
            out_ref[...] = out_ref[...] * inv_l

    return attn_kernel


# --------------------------------------------------------------------------
# Wrapper
# --------------------------------------------------------------------------
def graph_attention_layer(x, adj, weight, a, *, alpha):
    n, f_in = x.shape
    f_out = weight.shape[1]
    if f_out + 2 > _LANE:
        raise NotImplementedError("F_out + 2 must fit in one 128-lane slab")

    # Fused projection RHS: [ W | W@a1 | W@a2 | zero-pad ]  -> (F_in, 128).
    a1 = a[:f_out, :]
    a2 = a[f_out:, :]
    rhs = jnp.concatenate(
        [weight, weight @ a1, weight @ a2,
         jnp.zeros((f_in, _LANE - f_out - 2), jnp.float32)], axis=1)

    # Node padding at 128 granularity only (bounds padding waste); tiles are
    # then chosen as the largest of {512,256,128} that divide n_pad.
    n_pad = _round_up(n, _LANE)
    tk = _pick_tile(n_pad)
    # Keep >= 2 query tiles when possible so v7x's two TCs both get work.
    tq = _pick_tile(n_pad, min_tiles=2 if n_pad >= 2 * _LANE else 1)
    tq1 = _pick_tile(n_pad)  # projection row tile

    # Pad nodes; padded rows/cols of adj are 0 -> masked out of the softmax.
    x_p = jnp.zeros((n_pad, f_in), jnp.bfloat16).at[:n, :].set(
        x.astype(jnp.bfloat16))
    adj_p = jnp.zeros((n_pad, n_pad), jnp.int8).at[:n, :n].set(
        (adj > 0).astype(jnp.int8))

    # ---- Kernel 1: fused projection, two outputs -------------------------
    whv, scores = pl.pallas_call(
        make_proj_kernel(f_out),
        out_shape=(jax.ShapeDtypeStruct((n_pad, _LANE), jnp.bfloat16),
                   jax.ShapeDtypeStruct((n_pad, 2), jnp.float32)),
        grid_spec=pltpu.PrefetchScalarGridSpec(
            num_scalar_prefetch=0,
            grid=(n_pad // tq1,),
            in_specs=[pl.BlockSpec((tq1, f_in), lambda i: (i, 0)),
                      pl.BlockSpec((f_in, _LANE), lambda i: (0, 0))],
            out_specs=[pl.BlockSpec((tq1, _LANE), lambda i: (i, 0)),
                       pl.BlockSpec((tq1, 2), lambda i: (i, 0))]),
        compiler_params=pltpu.CompilerParams(
            dimension_semantics=("parallel",)),
    )(x_p, rhs.astype(jnp.bfloat16))

    # Tiny wrapper-side fixups (n_pad*4 bytes each, negligible HBM traffic).
    wh1 = scores[:, 0:1]                       # (n_pad, 1) f32
    wh2_row = scores[:, 1:2].T                 # (1, n_pad) f32

    # ---- VMEM budget / resident-whv decision (per generation) ------------
    try:
        vmem_cap = int(pltpu.get_tpu_info().vmem_capacity_bytes)
    except Exception:  # pragma: no cover - conservative fallback (v7x-sized)
        vmem_cap = 64 * 1024 * 1024
    budget = vmem_cap // 2

    fixed_bytes = (2 * tq * tk                 # adj int8, double-buffered
                   + 2 * tq * _LANE * 4        # out f32, double-buffered
                   + 2 * (tq + tk) * 4         # wh1 / wh2 tiles
                   + 2 * tq * 4)               # m, l scratch
    whv_slab_bytes = n_pad * _LANE * 2         # bf16 value slab
    resident_cost = fixed_bytes + 2 * whv_slab_bytes   # allow double-buffer
    tiled_cost = fixed_bytes + 2 * tk * _LANE * 2

    resident_whv = resident_cost <= budget
    k2_vmem = resident_cost if resident_whv else tiled_cost
    vmem_limit = int(min(vmem_cap * 3 // 4,
                         max(32 * 1024 * 1024, k2_vmem + (8 << 20))))

    if resident_whv:
        whv_spec = pl.BlockSpec((n_pad, _LANE), lambda i, j: (0, 0))
    else:
        whv_spec = pl.BlockSpec((tk, _LANE), lambda i, j: (j, 0))

    # ---- Kernel 2: tiled masked softmax + aggregation ---------------------
    out = pl.pallas_call(
        make_attention_kernel(alpha, tk, resident_whv),
        out_shape=jax.ShapeDtypeStruct((n_pad, _LANE), jnp.float32),
        grid_spec=pltpu.PrefetchScalarGridSpec(
            num_scalar_prefetch=0,
            grid=(n_pad // tq, n_pad // tk),
            in_specs=[pl.BlockSpec((tq, 1), lambda i, j: (i, 0)),
                      pl.BlockSpec((1, tk), lambda i, j: (0, j)),
                      pl.BlockSpec((tq, tk), lambda i, j: (i, j)),
                      whv_spec],
            out_specs=pl.BlockSpec((tq, _LANE), lambda i, j: (i, 0)),
            scratch_shapes=[pltpu.VMEM((tq, 1), jnp.float32),    # m
                            pltpu.VMEM((tq, 1), jnp.float32)]),  # l
        compiler_params=pltpu.CompilerParams(
            dimension_semantics=("parallel", "arbitrary"),
            vmem_limit_bytes=vmem_limit),
    )(wh1, wh2_row, adj_p, whv)

    return out[:n, :f_out]


# --------------------------------------------------------------------------
# References
# --------------------------------------------------------------------------
def reference_forward(x, adj, weight, a, *, alpha):
    """Pure-f32 JAX reference mirroring the PyTorch module (eval mode)."""
    f_out = weight.shape[1]
    Wh = x @ weight
    Wh1 = Wh @ a[:f_out, :]
    Wh2 = Wh @ a[f_out:, :]
    e = Wh1 + Wh2.T
    e = jnp.where(e > 0, e, alpha * e)
    att = jnp.where(adj > 0, e, jnp.full_like(e, -9e15))
    att = jax.nn.softmax(att, axis=-1)
    return att @ Wh


def reference_mixed(x, adj, weight, a, *, alpha):
    """Reference with the same bf16-MXU / f32-softmax mixed precision."""
    f_out = weight.shape[1]
    rhs = jnp.concatenate(
        [weight, weight @ a[:f_out, :], weight @ a[f_out:, :]], axis=1)
    wh_ext = jnp.dot(x.astype(jnp.bfloat16), rhs.astype(jnp.bfloat16),
                     preferred_element_type=jnp.float32)
    wh = wh_ext[:, :f_out]
    e = wh_ext[:, f_out:f_out + 1] + wh_ext[:, f_out + 1:f_out + 2].T
    e = jnp.where(e > 0, e, alpha * e)
    att = jnp.where(adj > 0, e, -9e15)
    att = jax.nn.softmax(att, axis=-1)
    return jnp.dot(att.astype(jnp.bfloat16), wh.astype(jnp.bfloat16),
                   preferred_element_type=jnp.float32)


if __name__ == "__main__":
    ALPHA = 0.2  # LeakyReLU negative slope

    def run_case(seed, N, F_IN, F_OUT, tol_mix, tol_f32):
        key = jax.random.fold_in(jax.random.PRNGKey(0), seed)
        k_x, k_adj, k_w, k_a = jax.random.split(key, 4)

        x = jax.random.normal(k_x, (N, F_IN), dtype=jnp.float32)

        # Random symmetric binary adjacency with self-loops.
        raw = jax.random.uniform(k_adj, (N, N))
        adj = (raw + raw.T > 1.0).astype(jnp.float32)
        adj = jnp.maximum(adj, jnp.eye(N, dtype=jnp.float32))

        # Deterministic parameter init matching reset_parameters():
        #   weight: xavier_uniform_, a: xavier_normal_.
        w_bound = (6.0 / (F_IN + F_OUT)) ** 0.5
        weight = jax.random.uniform(k_w, (F_IN, F_OUT), dtype=jnp.float32,
                                    minval=-w_bound, maxval=w_bound)
        a_std = (2.0 / (2 * F_OUT + 1)) ** 0.5
        a = a_std * jax.random.normal(k_a, (2 * F_OUT, 1), dtype=jnp.float32)

        out = graph_attention_layer(x, adj, weight, a, alpha=ALPHA)
        out = jax.block_until_ready(out)
        assert out.shape == (N, F_OUT)

        # Tight check vs a reference with matching mixed precision
        # (validates softmax / masking / aggregation logic).
        ref_mix = reference_mixed(x, adj, weight, a, alpha=ALPHA)
        err_mix = float(jnp.max(jnp.abs(out - ref_mix)))
        assert jnp.allclose(out, ref_mix, atol=tol_mix, rtol=tol_mix), (
            f"mixed-precision mismatch (N={N}), max abs err = {err_mix}")

        # Loose check vs the pure-f32 module semantics (bf16 MXU operands
        # introduce ~1e-2-level error by construction).
        ref_f32 = reference_forward(x, adj, weight, a, alpha=ALPHA)
        err_f32 = float(jnp.max(jnp.abs(out - ref_f32)))
        assert jnp.allclose(out, ref_f32, atol=tol_f32, rtol=tol_f32), (
            f"f32-reference mismatch (N={N}), max abs err = {err_f32}")

    # Small problem matching the module's intended use (N, F_in) / (N, N).
    run_case(seed=0, N=8, F_IN=32, F_OUT=16, tol_mix=1e-2, tol_f32=5e-2)
    # Larger case exercising multi-tile grids and the resident-whv slicing.
    run_case(seed=1, N=300, F_IN=48, F_OUT=24, tol_mix=2e-2, tol_f32=1e-1)

    print("KERNEL_OK")
</pallas_src>

<mosaic_0001>
module attributes {stable_mosaic.version = 11 : i64} {
  func.func @proj_kernel(%arg0: i32, %arg1: memref<128x32xbf16, #tpu.memory_space<vmem>>, %arg2: memref<32x128xbf16, #tpu.memory_space<vmem>>, %arg3: memref<128x128xbf16, #tpu.memory_space<vmem>>, %arg4: memref<128x2xf32, #tpu.memory_space<vmem>>) attributes {dimension_semantics = [#tpu.dimension_semantics<parallel>], iteration_bounds = array<i64: 1>, scalar_prefetch = 0 : i64, scratch_operands = 0 : i64, tpu.core_type = #tpu.core_type<tc>, window_params = [{transform_indices = @transform_0, window_bounds = array<i64: 128, 32>}, {pipeline_mode = #tpu.pipeline_mode<synchronous>, transform_indices = @transform_1, window_bounds = array<i64: 32, 128>}, {transform_indices = @transform_2, window_bounds = array<i64: 128, 128>}, {transform_indices = @transform_3, window_bounds = array<i64: 128, 2>}]} {
    %c0 = arith.constant 0 : index
    %c0_0 = arith.constant 0 : index
    %0 = vector.load %arg1[%c0, %c0_0] : memref<128x32xbf16, #tpu.memory_space<vmem>>, vector<128x32xbf16>
    %c0_1 = arith.constant 0 : index
    %c0_2 = arith.constant 0 : index
    %1 = vector.load %arg2[%c0_1, %c0_2] : memref<32x128xbf16, #tpu.memory_space<vmem>>, vector<32x128xbf16>
    %cst = arith.constant dense<0.000000e+00> : vector<128x128xf32>
    %2 = tpu.matmul %0, %1, %cst {dimension_numbers = #tpu.dot_dimension_numbers<[1], [0], [0], [1], [0, 0, 1, 1], [], []>} : vector<128x32xbf16>, vector<32x128xbf16>, vector<128x128xf32> -> vector<128x128xf32>
    %3 = arith.truncf %2 : vector<128x128xf32> to vector<128x128xbf16>
    %c0_3 = arith.constant 0 : index
    %c0_4 = arith.constant 0 : index
    %4 = vector.load %arg3[%c0_3, %c0_4] : memref<128x128xbf16, #tpu.memory_space<vmem>>, vector<128x128xbf16>
    tpu.vector_store %arg3[%c0_3, %c0_4], %3 {strides = array<i32>} : memref<128x128xbf16, #tpu.memory_space<vmem>>, vector<128x128xbf16>,
    %5 = vector.extract_strided_slice %2 {offsets = [0, 16], sizes = [128, 2], strides = [1, 1]} : vector<128x128xf32> to vector<128x2xf32>
    %c0_5 = arith.constant 0 : index
    %c0_6 = arith.constant 0 : index
    %6 = vector.load %arg4[%c0_5, %c0_6] : memref<128x2xf32, #tpu.memory_space<vmem>>, vector<128x2xf32>
    tpu.vector_store %arg4[%c0_5, %c0_6], %5 {strides = array<i32>} : memref<128x2xf32, #tpu.memory_space<vmem>>, vector<128x2xf32>,
    return
  }
  func.func @transform_0(%arg0: i32) -> (i32, i32) {
    %c0_i32 = arith.constant 0 : i32
    %c0_i32_0 = arith.constant 0 : i32
    return %arg0, %c0_i32 : i32, i32
  }
  func.func @transform_1(%arg0: i32) -> (i32, i32) {
    %c0_i32 = arith.constant 0 : i32
    %c0_i32_0 = arith.constant 0 : i32
    %c0_i32_1 = arith.constant 0 : i32
    return %c0_i32, %c0_i32_0 : i32, i32
  }
  func.func @transform_2(%arg0: i32) -> (i32, i32) {
    %c0_i32 = arith.constant 0 : i32
    %c0_i32_0 = arith.constant 0 : i32
    return %arg0, %c0_i32 : i32, i32
  }
  func.func @transform_3(%arg0: i32) -> (i32, i32) {
    %c0_i32 = arith.constant 0 : i32
    %c0_i32_0 = arith.constant 0 : i32
    return %arg0, %c0_i32 : i32, i32
  }
}

</mosaic_0001>

<llo_original>
// kernel: tpu_custom_call.1
$region0: #{tpu_custom_call.1}
  #allocation0 [shape = 'u32[]', space=smem, size = 0x4, offset = 0x4, fixed_abs, tag = 'smem constant byte address 0x4 - core index']
  #allocation1 [shape = 'u32[144,128]{1,0:T(1,128)}', space=vmem, size = 0x12000, scoped, tag = 'internal scratch']
  %s0 = inlined_call_operand.vmem [shape: bf16[128,32], index: 0, kind: input, shape index: {}]
  %s1 = inlined_call_operand.vmem [shape: bf16[32,128], index: 1, kind: input, shape index: {}]
  %s2 = inlined_call_operand.hbm [shape: bf16[128,128], index: 2, kind: output, shape index: {0}]
  %s3 = inlined_call_operand.vmem [shape: f32[128,2], index: 3, kind: output, shape index: {1}]
  %4 = xla_tuple %s2, %s3
  %s5 = sld [smem:[#allocation0]]
  $region26: #{tpu_custom_call.1} parent=0
    _
  %s7 = ssub.s32 1, %s5
  %s8 = scalar_select 0, %s7, %s5
  $region1: #{tpu_custom_call.1} parent=0
    #allocation2 [shape = 'u8[32768]{0}', space=vmem, size = 0x8000, scoped, tag = 'output window, operand 0, single buffered']
    #allocation3 [shape = 's32[1]{0}', space=sflag, size = 0x4, scoped, tag = 'scoped memory for tpu_custom_call.1']
    %9 = vsyncpa [#allocation3], 0
    // Predicated region
    $region2: #{tpu_custom_call.1} parent=1 // pred_check
      _
    $region3: #{tpu_custom_call.1} parent=1 // pred_check_branch
      %11 = sbr.rel (0) target = $region5
    $region4: #{tpu_custom_call.1} parent=1 // pred_region
      _
    $region5: #{tpu_custom_call.1} parent=1 // pred_fallthru
      _
    // Predicated region
    $region6: #{tpu_custom_call.1} parent=1 // pred_check
      _
    $region7: #{tpu_custom_call.1} parent=1 // pred_check_branch
      %13 = sbr.rel (0) target = $region9
    $region8: #{tpu_custom_call.1} parent=1 // pred_region
      _
    $region9: #{tpu_custom_call.1} parent=1 // pred_fallthru
      _
    %v15 = vld [vmem:[%s0] sm:$0xf]
    %v16 = vld [vmem:[%s0 + $0x4] sm:$0xf]
    %v17 = vld [vmem:[%s0 + $0x8] sm:$0xf]
    %v18 = vld [vmem:[%s0 + $0xc] sm:$0xf]
    %v19 = vld [vmem:[%s0 + $0x10] sm:$0xf]
    %v20 = vld [vmem:[%s0 + $0x14] sm:$0xf]
    %v21 = vld [vmem:[%s0 + $0x18] sm:$0xf]
    %v22 = vld [vmem:[%s0 + $0x1c] sm:$0xf]
    %v23 = vld [vmem:[%s0 + $0x20] sm:$0xf]
    %v24 = vld [vmem:[%s0 + $0x24] sm:$0xf]
    %v25 = vld [vmem:[%s0 + $0x28] sm:$0xf]
    %v26 = vld [vmem:[%s0 + $0x2c] sm:$0xf]
    %v27 = vld [vmem:[%s0 + $0x30] sm:$0xf]
    %v28 = vld [vmem:[%s0 + $0x34] sm:$0xf]
    %v29 = vld [vmem:[%s0 + $0x38] sm:$0xf]
    %v30 = vld [vmem:[%s0 + $0x3c] sm:$0xf]
    %v31 = vld [vmem:[%s1] sm:$0xf]
    %v32 = vld [vmem:[%s1 + $0x4] sm:$0xf]
    %v33 = vld [vmem:[%s1 + $0x8] sm:$0xf]
    %v34 = vld [vmem:[%s1 + $0xc] sm:$0xf]
    %v51 = vunpack.c.l.b16 %v15
    %v52 = vunpack.c.l.b16 %v16
    %v53 = vunpack.c.l.b16 %v17
    %v54 = vunpack.c.l.b16 %v18
    %v55 = vunpack.c.l.b16 %v19
    %v56 = vunpack.c.l.b16 %v20
    %v57 = vunpack.c.l.b16 %v21
    %v58 = vunpack.c.l.b16 %v22
    %v59 = vunpack.c.l.b16 %v23
    %v60 = vunpack.c.l.b16 %v24
    %v61 = vunpack.c.l.b16 %v25
    %v62 = vunpack.c.l.b16 %v26
    %v63 = vunpack.c.l.b16 %v27
    %v64 = vunpack.c.l.b16 %v28
    %v65 = vunpack.c.l.b16 %v29
    %v66 = vunpack.c.l.b16 %v30
    %v67 = vpack.c.b16 %v52, %v51
    %v68 = vpack.c.b16 %v54, %v53
    %v69 = vpack.c.b16 %v56, %v55
    %v70 = vpack.c.b16 %v58, %v57
    %v71 = vpack.c.b16 %v60, %v59
    %v72 = vpack.c.b16 %v62, %v61
    %v73 = vpack.c.b16 %v64, %v63
    %v74 = vpack.c.b16 %v66, %v65
    %v79 = vunpack.c.l.b16 %v31
    %v80 = vunpack.c.l.b16 %v32
    %v81 = vunpack.c.l.b16 %v33
    %v82 = vunpack.c.l.b16 %v34
    %v83 = vpack.c.b16 %v80, %v79
    %v84 = vpack.c.b16 %v82, %v81
    %vm87 = vcmask 261120
    %v89 = vsel %vm87, %v67, 0
    %v92 = vsel %vm87, %v68, 0
    %v95 = vsel %vm87, %v69, 0
    %v98 = vsel %vm87, %v70, 0
    %v101 = vsel %vm87, %v71, 0
    %v104 = vsel %vm87, %v72, 0
    %v107 = vsel %vm87, %v73, 0
    %v110 = vsel %vm87, %v74, 0
    %112 = vmatprep.subr.bf16.mxu0 0
    %113 = vmatpush1.bf16.msra.mxu0 0
    %114 = vmatprep.subr.bf16.mxu0 0
    %115 = vmatpush1.bf16.msra.mxu0 0
    %116 = vmatprep.subr.bf16.mxu0 0
    %117 = vmatpush1.bf16.msra.mxu0 0
    %118 = vmatprep.subr.bf16.mxu0 0
    %119 = vmatpush1.bf16.msra.mxu0 0
    %120 = vmatprep.subr.bf16.mxu0 0
    %121 = vmatpush1.bf16.msra.mxu0 0
    %122 = vmatprep.subr.bf16.mxu0 0
    %123 = vmatpush1.bf16.msra.mxu0 0
    %124 = vmatprep.subr.bf16.mxu0 0
    %125 = vmatpush1.bf16.msra.mxu0 %v84
    %126 = vmatprep.subr.bf16.mxu0 0
    %127 = vmatpush1.bf16.msra.mxu0 %v83
    %128 = vmatprep.subr.bf16.mxu0 0
    %129 = vmatpush2.bf16.msra.mxu0 0
    %130 = vmatprep.subr.bf16.mxu0 0
    %131 = vmatpush2.bf16.msra.mxu0 0
    %132 = vmatprep.subr.bf16.mxu0 0
    %133 = vmatpush2.bf16.msra.mxu0 0
    %134 = vmatprep.subr.bf16.mxu0 0
    %135 = vmatpush2.bf16.msra.mxu0 0
    %136 = vmatprep.subr.bf16.mxu0 0
    %137 = vmatpush2.bf16.msra.mxu0 0
    %138 = vmatprep.subr.bf16.mxu0 0
    %139 = vmatpush2.bf16.msra.mxu0 0
    %140 = vmatprep.subr.bf16.mxu0 0
    %141 = vmatpush2.bf16.msra.mxu0 0
    %142 = vmatprep.subr.bf16.mxu0 0
    %143 = vmatpush2.bf16.msra.mxu0 0
    %144 = vmatprep.mubr.bf16.mxu0 0
    %145 = vmatmul.mubr.bf16.gmra.mxu0 %v89
    %v146 = vpop.f32.mrf.mxu0
    %v147 = vadd.f32 0.0, %v146
    %v148 = vpop.f32.mrf.mxu0
    %v149 = vpop.f32.mrf.mxu0
    %v150 = vadd.f32 0.0, %v149
    %v151 = vpop.f32.mrf.mxu0
    %152 = vmatprep.mubr.bf16.mxu0 0
    %153 = vmatmul.mubr.bf16.gmra.mxu0 %v92
    %v154 = vpop.f32.mrf.mxu0
    %v155 = vadd.f32 0.0, %v154
    %v156 = vpop.f32.mrf.mxu0
    %v157 = vpop.f32.mrf.mxu0
    %v158 = vadd.f32 0.0, %v157
    %v159 = vpop.f32.mrf.mxu0
    %160 = vmatprep.mubr.bf16.mxu0 0
    %161 = vmatmul.mubr.bf16.gmra.mxu0 %v95
    %v162 = vpop.f32.mrf.mxu0
    %v163 = vadd.f32 0.0, %v162
    %v164 = vpop.f32.mrf.mxu0
    %v165 = vpop.f32.mrf.mxu0
    %v166 = vadd.f32 0.0, %v165
    %v167 = vpop.f32.mrf.mxu0
    %168 = vmatprep.mubr.bf16.mxu0 0
    %169 = vmatmul.mubr.bf16.gmra.mxu0 %v98
    %v170 = vpop.f32.mrf.mxu0
    %v171 = vadd.f32 0.0, %v170
    %v172 = vpop.f32.mrf.mxu0
    %v173 = vpop.f32.mrf.mxu0
    %v174 = vadd.f32 0.0, %v173
    %v175 = vpop.f32.mrf.mxu0
    %176 = vmatprep.mubr.bf16.mxu0 0
    %177 = vmatmul.mubr.bf16.gmra.mxu0 %v101
    %v178 = vpop.f32.mrf.mxu0
    %v179 = vadd.f32 0.0, %v178
    %v180 = vpop.f32.mrf.mxu0
    %v181 = vpop.f32.mrf.mxu0
    %v182 = vadd.f32 0.0, %v181
    %v183 = vpop.f32.mrf.mxu0
    %184 = vmatprep.mubr.bf16.mxu0 0
    %185 = vmatmul.mubr.bf16.gmra.mxu0 %v104
    %v186 = vpop.f32.mrf.mxu0
    %v187 = vadd.f32 0.0, %v186
    %v188 = vpop.f32.mrf.mxu0
    %v189 = vpop.f32.mrf.mxu0
    %v190 = vadd.f32 0.0, %v189
    %v191 = vpop.f32.mrf.mxu0
    %192 = vmatprep.mubr.bf16.mxu0 0
    %193 = vmatmul.mubr.bf16.gmra.mxu0 %v107
    %v194 = vpop.f32.mrf.mxu0
    %v195 = vadd.f32 0.0, %v194
    %v196 = vpop.f32.mrf.mxu0
    %v197 = vpop.f32.mrf.mxu0
    %v198 = vadd.f32 0.0, %v197
    %v199 = vpop.f32.mrf.mxu0
    %200 = vmatprep.mubr.bf16.mxu0 0
    %201 = vmatmul.mubr.bf16.gmra.mxu0 %v110
    %v202 = vpop.f32.mrf.mxu0
    %v203 = vadd.f32 0.0, %v202
    %v204 = vpop.f32.mrf.mxu0
    %v205 = vpop.f32.mrf.mxu0
    %v206 = vadd.f32 0.0, %v205
    %v207 = vpop.f32.mrf.mxu0
    %208 = vdwg.mxu0
    %v209 = vpack.c.bf16 %v150, %v147
    %v210 = vpack.c.bf16 %v158, %v155
    %v211 = vpack.c.bf16 %v166, %v163
    %v212 = vpack.c.bf16 %v174, %v171
    %v213 = vpack.c.bf16 %v182, %v179
    %v214 = vpack.c.bf16 %v190, %v187
    %v215 = vpack.c.bf16 %v198, %v195
    %v216 = vpack.c.bf16 %v206, %v203
    %v225 = vunpack.c.l.b16 %v209
    %v226 = vunpack.c.h.b16 %v209
    %v227 = vunpack.c.l.b16 %v210
    %v228 = vunpack.c.h.b16 %v210
    %v229 = vunpack.c.l.b16 %v211
    %v230 = vunpack.c.h.b16 %v211
    %v231 = vunpack.c.l.b16 %v212
    %v232 = vunpack.c.h.b16 %v212
    %v233 = vunpack.c.l.b16 %v213
    %v234 = vunpack.c.h.b16 %v213
    %v235 = vunpack.c.l.b16 %v214
    %v236 = vunpack.c.h.b16 %v214
    %v237 = vunpack.c.l.b16 %v215
    %v238 = vunpack.c.h.b16 %v215
    %v239 = vunpack.c.l.b16 %v216
    %v240 = vunpack.c.h.b16 %v216
    %v241 = vpack.c.b16 %v225, %v225
    %v242 = vpack.c.b16 %v226, %v226
    %v243 = vpack.c.b16 %v227, %v227
    %v244 = vpack.c.b16 %v228, %v228
    %v245 = vpack.c.b16 %v229, %v229
    %v246 = vpack.c.b16 %v230, %v230
    %v247 = vpack.c.b16 %v231, %v231
    %v248 = vpack.c.b16 %v232, %v232
    %v249 = vpack.c.b16 %v233, %v233
    %v250 = vpack.c.b16 %v234, %v234
    %v251 = vpack.c.b16 %v235, %v235
    %v252 = vpack.c.b16 %v236, %v236
    %v253 = vpack.c.b16 %v237, %v237
    %v254 = vpack.c.b16 %v238, %v238
    %v255 = vpack.c.b16 %v239, %v239
    %v256 = vpack.c.b16 %v240, %v240
    %273 = vst [vmem:[#allocation2] sm:$0xf] %v241
    %274 = vst [vmem:[#allocation2 + $0x4] sm:$0xf] %v242
    %275 = vst [vmem:[#allocation2 + $0x8] sm:$0xf] %v243
    %276 = vst [vmem:[#allocation2 + $0xc] sm:$0xf] %v244
    %277 = vst [vmem:[#allocation2 + $0x10] sm:$0xf] %v245
    %278 = vst [vmem:[#allocation2 + $0x14] sm:$0xf] %v246
    %279 = vst [vmem:[#allocation2 + $0x18] sm:$0xf] %v247
    %280 = vst [vmem:[#allocation2 + $0x1c] sm:$0xf] %v248
    %281 = vst [vmem:[#allocation2 + $0x20] sm:$0xf] %v249
    %282 = vst [vmem:[#allocation2 + $0x24] sm:$0xf] %v250
    %283 = vst [vmem:[#allocation2 + $0x28] sm:$0xf] %v251
    %284 = vst [vmem:[#allocation2 + $0x2c] sm:$0xf] %v252
    %285 = vst [vmem:[#allocation2 + $0x30] sm:$0xf] %v253
    %286 = vst [vmem:[#allocation2 + $0x34] sm:$0xf] %v254
    %287 = vst [vmem:[#allocation2 + $0x38] sm:$0xf] %v255
    %288 = vst [vmem:[#allocation2 + $0x3c] sm:$0xf] %v256
    %305 = vrot.lane.b32.xlu0 %v147, 112
    %v306 = vpop.permute.xlu0 %305
    %307 = vrot.lane.b32.xlu0 %v150, 112
    %v308 = vpop.permute.xlu0 %307
    %309 = vrot.lane.b32.xlu0 %v155, 112
    %v310 = vpop.permute.xlu0 %309
    %311 = vrot.lane.b32.xlu0 %v158, 112
    %v312 = vpop.permute.xlu0 %311
    %313 = vrot.lane.b32.xlu0 %v163, 112
    %v314 = vpop.permute.xlu0 %313
    %315 = vrot.lane.b32.xlu0 %v166, 112
    %v316 = vpop.permute.xlu0 %315
    %317 = vrot.lane.b32.xlu0 %v171, 112
    %v318 = vpop.permute.xlu0 %317
    %319 = vrot.lane.b32.xlu0 %v174, 112
    %v320 = vpop.permute.xlu0 %319
    %321 = vrot.lane.b32.xlu0 %v179, 112
    %v322 = vpop.permute.xlu0 %321
    %323 = vrot.lane.b32.xlu0 %v182, 112
    %v324 = vpop.permute.xlu0 %323
    %325 = vrot.lane.b32.xlu0 %v187, 112
    %v326 = vpop.permute.xlu0 %325
    %327 = vrot.lane.b32.xlu0 %v190, 112
    %v328 = vpop.permute.xlu0 %327
    %329 = vrot.lane.b32.xlu0 %v195, 112
    %v330 = vpop.permute.xlu0 %329
    %331 = vrot.lane.b32.xlu0 %v198, 112
    %v332 = vpop.permute.xlu0 %331
    %333 = vrot.lane.b32.xlu0 %v203, 112
    %v334 = vpop.permute.xlu0 %333
    %335 = vrot.lane.b32.xlu0 %v206, 112
    %v336 = vpop.permute.xlu0 %335
    %vm353 = vcmask 15360
    %354 = vst.msk [vmem:[%s3] sm:$0xff] %vm353, %v306
    %355 = vst.msk [vmem:[%s3 + $0x8] sm:$0xff] %vm353, %v308
    %356 = vst.msk [vmem:[%s3 + $0x10] sm:$0xff] %vm353, %v310
    %357 = vst.msk [vmem:[%s3 + $0x18] sm:$0xff] %vm353, %v312
    %358 = vst.msk [vmem:[%s3 + $0x20] sm:$0xff] %vm353, %v314
    %359 = vst.msk [vmem:[%s3 + $0x28] sm:$0xff] %vm353, %v316
    %360 = vst.msk [vmem:[%s3 + $0x30] sm:$0xff] %vm353, %v318
    %361 = vst.msk [vmem:[%s3 + $0x38] sm:$0xff] %vm353, %v320
    %362 = vst.msk [vmem:[%s3 + $0x40] sm:$0xff] %vm353, %v322
    %363 = vst.msk [vmem:[%s3 + $0x48] sm:$0xff] %vm353, %v324
    %364 = vst.msk [vmem:[%s3 + $0x50] sm:$0xff] %vm353, %v326
    %365 = vst.msk [vmem:[%s3 + $0x58] sm:$0xff] %vm353, %v328
    %366 = vst.msk [vmem:[%s3 + $0x60] sm:$0xff] %vm353, %v330
    %367 = vst.msk [vmem:[%s3 + $0x68] sm:$0xff] %vm353, %v332
    %368 = vst.msk [vmem:[%s3 + $0x70] sm:$0xff] %vm353, %v334
    %369 = vst.msk [vmem:[%s3 + $0x78] sm:$0xff] %vm353, %v336
    // Predicated region
    $region10: #{tpu_custom_call.1} parent=1 // pred_check
      _
    $region11: #{tpu_custom_call.1} parent=1 // pred_check_branch
      %371 = sbr.rel (0) target = $region13
    $region12: #{tpu_custom_call.1} parent=1 // pred_region
      %s373 = ssub.s32 1024, 1024
      %374 = vsyncadd [#allocation3], %s373
      %s375 = sshll.u32 [#allocation2], 4
      %s376 = int_to_ptr.vmem [resolvable:$true] %s375
      %381 = dma.vmem_to_hbm [thread:$0]  %s376, 1024, %s2, [#allocation3], 64, 64, 4
    $region13: #{tpu_custom_call.1} parent=1 // pred_fallthru
      _
    // Predicated region
    $region14: #{tpu_custom_call.1} parent=1 // pred_check
      _
    $region15: #{tpu_custom_call.1} parent=1 // pred_check_branch
      %383 = sbr.rel (0) target = $region17
    $region16: #{tpu_custom_call.1} parent=1 // pred_region
      _
    $region17: #{tpu_custom_call.1} parent=1 // pred_fallthru
      _
    // Predicated region
    $region18: #{tpu_custom_call.1} parent=1 // pred_check
      _
    $region19: #{tpu_custom_call.1} parent=1 // pred_check_branch
      %385 = sbr.rel (0) target = $region21
    $region20: #{tpu_custom_call.1} parent=1 // pred_region
      %386 = dma.done [#allocation3], 1024
    $region21: #{tpu_custom_call.1} parent=1 // pred_fallthru
      _
    // Predicated region
    $region22: #{tpu_custom_call.1} parent=1 // pred_check
      _
    $region23: #{tpu_custom_call.1} parent=1 // pred_check_branch
      %388 = sbr.rel (0) target = $region25
    $region24: #{tpu_custom_call.1} parent=1 // pred_region
      _
    $region25: #{tpu_custom_call.1} parent=1 // pred_fallthru
      _
    %389 = vsyncpa [#allocation3], 1

</llo_original>
